<compile_context>
chip_gen: v7x
topology: tpu7x:2x2x1
jax: 0.10.0
libtpu: 0.0.40
codegen_flags: <defaults>
</compile_context>

<pallas_src>
import math

import jax
import jax.numpy as jnp
from jax.experimental import pallas as pl
from jax.experimental.pallas import tpu as pltpu


def _posenc_add_kernel(x_ref, pe_ref, o_ref):
    # x_ref / o_ref: (B, ts, D); pe_ref: (1, ts, D), broadcast over batch.
    # Compute in fp32 (PyTorch promotes x + fp32 pe buffer); cast on store
    # only (no-op for fp32 inputs).  Pure VPU elementwise add — HBM bound.
    x = x_ref[...].astype(jnp.float32)
    pe = pe_ref[...].astype(jnp.float32)
    o_ref[...] = (x + pe).astype(o_ref.dtype)


def make_positional_encoding(d_model: int, max_len: int = 512) -> jnp.ndarray:
    """Deterministic fp32 sinusoidal table matching the PyTorch __init__.

    (Also handles odd d_model, where the original PyTorch code would raise a
    shape mismatch: the cos half uses only the first floor(d/2) frequencies.)
    """
    position = jnp.arange(0, max_len, dtype=jnp.float32)[:, None]          # (max_len, 1)
    div_term = jnp.exp(
        jnp.arange(0, d_model, 2, dtype=jnp.float32)
        * (-math.log(10000.0) / d_model)
    )                                                                       # (ceil(d/2),)
    pe = jnp.zeros((max_len, d_model), dtype=jnp.float32)
    pe = pe.at[:, 0::2].set(jnp.sin(position * div_term))
    pe = pe.at[:, 1::2].set(jnp.cos(position * div_term[: d_model // 2]))
    return pe[None, :, :]                                                   # (1, max_len, d_model)


def _choose_seq_tile(B: int, S: int, D: int, x_itemsize: int,
                     target_x_block_bytes: int = 4 << 20,
                     split_threshold_bytes: int = 1 << 20) -> int:
    """Pick an S-tile (sublane axis) for a (B, ts, D) x-block.

    ts is a multiple of the sublane packing (8 for >=32-bit, 16 for bf16, ...)
    that divides S and keeps one x-block within ~target_x_block_bytes; for
    inputs bigger than split_threshold we force >= 2 grid steps so both v7x
    TensorCores get work.  Falls back to the full extent (always legal) when
    S is not packing-aligned.
    """
    sub = 8 if x_itemsize >= 4 else max(8, 32 // x_itemsize)
    if S <= sub or S % sub != 0:
        return S
    row_bytes = max(1, B * D * x_itemsize)            # bytes per seq position in an x-block
    budget_rows = target_x_block_bytes // row_bytes
    total_bytes = B * S * D * x_itemsize
    if total_bytes >= 2 * split_threshold_bytes:
        budget_rows = min(budget_rows, S // 2)         # >= 2 grid steps for megacore
    budget_rows = min(S, max(sub, (budget_rows // sub) * sub))
    for ts in range(budget_rows, sub - 1, -sub):
        if S % ts == 0:
            return ts
    return S


def positional_encoding_forward(x: jnp.ndarray, pe: jnp.ndarray) -> jnp.ndarray:
    """x: (B, S, D); pe: (1, max_len, D) fp32.  Returns x + pe[:, :S, :]."""
    B, S, D = x.shape
    _, max_len, d_pe = pe.shape
    assert S <= max_len, f"sequence length {S} exceeds max_len {max_len}"
    assert d_pe == D, "pe d_model does not match x"

    out_dtype = jnp.promote_types(x.dtype, pe.dtype)   # matches PyTorch promotion
    ts = _choose_seq_tile(B, S, D, jnp.dtype(x.dtype).itemsize)
    n_tiles = S // ts                                   # ts divides S or ts == S

    # Fast path: pass the whole pe buffer (no per-call slice copy) and let the
    # BlockSpec read only the first S rows.  That requires ts % 8 == 0 for the
    # fp32 pe block; otherwise (S not 8-aligned, ts == S) slice so the block's
    # sublane dim equals pe's full extent.
    pe_arg = pe if ts % 8 == 0 else pe[:, :S, :]

    return pl.pallas_call(
        _posenc_add_kernel,
        out_shape=jax.ShapeDtypeStruct((B, S, D), out_dtype),
        grid_spec=pltpu.PrefetchScalarGridSpec(
            num_scalar_prefetch=0,
            grid=(n_tiles,),
            in_specs=[
                # x: full batch, S tiled on the sublane axis, full D on lanes.
                pl.BlockSpec((B, ts, D), lambda j: (0, j, 0)),
                # pe: depends only on the S-tile index -> fetched once per tile.
                pl.BlockSpec((1, ts, D), lambda j: (0, j, 0)),
            ],
            out_specs=pl.BlockSpec((B, ts, D), lambda j: (0, j, 0)),
        ),
        compiler_params=pltpu.CompilerParams(
            dimension_semantics=("parallel",),
            vmem_limit_bytes=40 << 20,
        ),
    )(x, pe_arg)


if __name__ == "__main__":
    key = jax.random.PRNGKey(0)
    MAX_LEN = 512

    # --- Main demo: small shapes consistent with the module -----------------
    B, S, D = 2, 8, 32
    x = jax.random.normal(key, (B, S, D), dtype=jnp.float32)
    pe = make_positional_encoding(D, MAX_LEN)

    out = positional_encoding_forward(x, pe)
    out = jax.block_until_ready(out)

    ref = x + pe[:, :S, :]
    assert out.shape == (B, S, D)
    assert out.dtype == jnp.float32
    assert jnp.allclose(out, ref, atol=1e-6), "mismatch vs reference (demo)"

    # --- Secondary check: odd d_model (non-128 lane width, full-extent D) ---
    B2, S2, D2 = 2, 24, 33
    x2 = jax.random.normal(jax.random.PRNGKey(1), (B2, S2, D2), dtype=jnp.float32)
    pe2 = make_positional_encoding(D2, MAX_LEN)

    out2 = jax.block_until_ready(positional_encoding_forward(x2, pe2))
    ref2 = x2 + pe2[:, :S2, :]
    assert jnp.allclose(out2, ref2, atol=1e-6), "mismatch vs reference (odd D)"

    # --- Third check: bf16 input, fp32 pe -> fp32 output (PyTorch promotion) -
    x3 = jax.random.normal(jax.random.PRNGKey(2), (B, S, D), dtype=jnp.bfloat16)
    out3 = jax.block_until_ready(positional_encoding_forward(x3, pe))
    ref3 = x3.astype(jnp.float32) + pe[:, :S, :]
    assert out3.dtype == jnp.float32
    assert jnp.allclose(out3, ref3, atol=1e-6), "mismatch vs reference (bf16)"

    print("KERNEL_OK")
</pallas_src>

<mosaic_0001>
module attributes {stable_mosaic.version = 11 : i64} {
  func.func @_posenc_add_kernel(%arg0: i32, %arg1: memref<2x8x32xf32, #tpu.memory_space<vmem>>, %arg2: memref<1x8x32xf32, #tpu.memory_space<vmem>>, %arg3: memref<2x8x32xf32, #tpu.memory_space<vmem>>) attributes {dimension_semantics = [#tpu.dimension_semantics<parallel>], iteration_bounds = array<i64: 1>, scalar_prefetch = 0 : i64, scratch_operands = 0 : i64, tpu.core_type = #tpu.core_type<tc>, window_params = [{transform_indices = @transform_0, window_bounds = array<i64: 2, 8, 32>}, {transform_indices = @transform_1, window_bounds = array<i64: 1, 8, 32>}, {transform_indices = @transform_2, window_bounds = array<i64: 2, 8, 32>}]} {
    %c0 = arith.constant 0 : index
    %c0_0 = arith.constant 0 : index
    %c0_1 = arith.constant 0 : index
    %0 = vector.load %arg1[%c0, %c0_0, %c0_1] : memref<2x8x32xf32, #tpu.memory_space<vmem>>, vector<2x8x32xf32>
    %c0_2 = arith.constant 0 : index
    %c0_3 = arith.constant 0 : index
    %c0_4 = arith.constant 0 : index
    %1 = vector.load %arg2[%c0_2, %c0_3, %c0_4] : memref<1x8x32xf32, #tpu.memory_space<vmem>>, vector<1x8x32xf32>
    %2 = vector.broadcast %1 : vector<1x8x32xf32> to vector<2x8x32xf32>
    %3 = arith.addf %0, %2 : vector<2x8x32xf32>
    %c0_5 = arith.constant 0 : index
    %c0_6 = arith.constant 0 : index
    %c0_7 = arith.constant 0 : index
    %4 = vector.load %arg3[%c0_5, %c0_6, %c0_7] : memref<2x8x32xf32, #tpu.memory_space<vmem>>, vector<2x8x32xf32>
    tpu.vector_store %arg3[%c0_5, %c0_6, %c0_7], %3 {strides = array<i32>} : memref<2x8x32xf32, #tpu.memory_space<vmem>>, vector<2x8x32xf32>,
    return
  }
  func.func @transform_0(%arg0: i32) -> (i32, i32, i32) {
    %c0_i32 = arith.constant 0 : i32
    %c0_i32_0 = arith.constant 0 : i32
    %c0_i32_1 = arith.constant 0 : i32
    return %c0_i32, %arg0, %c0_i32_0 : i32, i32, i32
  }
  func.func @transform_1(%arg0: i32) -> (i32, i32, i32) {
    %c0_i32 = arith.constant 0 : i32
    %c0_i32_0 = arith.constant 0 : i32
    %c0_i32_1 = arith.constant 0 : i32
    return %c0_i32, %arg0, %c0_i32_0 : i32, i32, i32
  }
  func.func @transform_2(%arg0: i32) -> (i32, i32, i32) {
    %c0_i32 = arith.constant 0 : i32
    %c0_i32_0 = arith.constant 0 : i32
    %c0_i32_1 = arith.constant 0 : i32
    return %c0_i32, %arg0, %c0_i32_0 : i32, i32, i32
  }
}

</mosaic_0001>

<llo_original>
// kernel: tpu_custom_call.1
$region0: #{tpu_custom_call.1}
  #allocation0 [shape = 'u32[]', space=smem, size = 0x4, offset = 0x4, fixed_abs, tag = 'smem constant byte address 0x4 - core index']
  #allocation1 [shape = 'u32[144,128]{1,0:T(1,128)}', space=vmem, size = 0x12000, scoped, tag = 'internal scratch']
  %s0 = inlined_call_operand.vmem [shape: f32[2,8,32], index: 0, kind: input, shape index: {}]
  %s1 = inlined_call_operand.vmem [shape: f32[1,512,32], index: 1, kind: input, shape index: {}]
  %s2 = inlined_call_operand.hbm [shape: f32[2,8,32], index: 2, kind: output, shape index: {}]
  %s3 = sld [smem:[#allocation0]]
  $region18: #{tpu_custom_call.1} parent=0
    _
  %s5 = ssub.s32 1, %s3
  %s6 = scalar_select 0, %s5, %s3
  $region1: #{tpu_custom_call.1} parent=0
    #allocation2 [shape = 'u8[8192]{0}', space=vmem, size = 0x2000, scoped, tag = 'output window, operand 0, single buffered']
    #allocation3 [shape = 's32[1]{0}', space=sflag, size = 0x4, scoped, tag = 'scoped memory for tpu_custom_call.1']
    %7 = vsyncpa [#allocation3], 0
    // Predicated region
    $region2: #{tpu_custom_call.1} parent=1 // pred_check
      _
    $region3: #{tpu_custom_call.1} parent=1 // pred_check_branch
      %9 = sbr.rel (0) target = $region5
    $region4: #{tpu_custom_call.1} parent=1 // pred_region
      _
    $region5: #{tpu_custom_call.1} parent=1 // pred_fallthru
      _
    // Predicated region
    $region6: #{tpu_custom_call.1} parent=1 // pred_check
      _
    $region7: #{tpu_custom_call.1} parent=1 // pred_check_branch
      %11 = sbr.rel (0) target = $region9
    $region8: #{tpu_custom_call.1} parent=1 // pred_region
      _
    $region9: #{tpu_custom_call.1} parent=1 // pred_fallthru
      _
    %v12 = vld [vmem:[%s0] sm:$0xff]
    %v13 = vld [vmem:[%s0 + $0x8] sm:$0xff]
    %v14 = vld [vmem:[%s1] sm:$0xff]
    %v15 = vadd.f32 %v12, %v14
    %v16 = vadd.f32 %v13, %v14
    %vm17 = vcmask 261120
    %18 = vst.msk [vmem:[#allocation2] sm:$0xff] %vm17, %v15
    %19 = vst.msk [vmem:[#allocation2 + $0x8] sm:$0xff] %vm17, %v16
    // Predicated region
    $region10: #{tpu_custom_call.1} parent=1 // pred_check
      _
    $region11: #{tpu_custom_call.1} parent=1 // pred_check_branch
      %21 = sbr.rel (0) target = $region13
    $region12: #{tpu_custom_call.1} parent=1 // pred_region
      %s23 = ssub.s32 256, 256
      %24 = vsyncadd [#allocation3], %s23
      %s25 = sshll.u32 [#allocation2], 4
      %s26 = int_to_ptr.vmem [resolvable:$true] %s25
      %31 = dma.vmem_to_hbm [thread:$0]  %s26, 256, %s2, [#allocation3], 128, 128, 8
    $region13: #{tpu_custom_call.1} parent=1 // pred_fallthru
      _
    // Predicated region
    $region14: #{tpu_custom_call.1} parent=1 // pred_check
      _
    $region15: #{tpu_custom_call.1} parent=1 // pred_check_branch
      %33 = sbr.rel (0) target = $region17
    $region16: #{tpu_custom_call.1} parent=1 // pred_region
      %34 = dma.done [#allocation3], 256
    $region17: #{tpu_custom_call.1} parent=1 // pred_fallthru
      _
    %35 = vsyncpa [#allocation3], 1

</llo_original>
